<compile_context>
chip_gen: v7x
topology: tpu7x:2x2x1
jax: 0.10.0
libtpu: 0.0.40
codegen_flags: <defaults>
</compile_context>

<pallas_src>
from functools import partial

import jax
import jax.numpy as jnp
from jax.experimental import pallas as pl
from jax.experimental.pallas import tpu as pltpu  # noqa: F401  (TPU backend)

EPS = 1e-5
H = 128          # padded feature width (lane-dense)
HP = H + 16      # slab rows: 128 weight rows + bias row (128) + zero pad to a
                 # multiple of the bf16 sublane tile (16)


def actor_kernel(x_ref, w_ref, out_ref):
    """x_ref: [B, H] f32 zero-padded states; w_ref: [HP, 4H] bf16 slab.

    Slab layout per layer k (columns k*H .. (k+1)*H):
      rows 0..127  -> weight block (zero-padded)
      row  128     -> bias (zero-padded)
      rows 129..143-> zero
    """
    x = x_ref[...]                                           # [B, H] f32

    # --- BatchNorm1d (training mode: batch mean, biased variance). ---
    # gamma/beta are already folded into the fc1 weights/bias.
    mean = jnp.mean(x, axis=0, keepdims=True)                # [1, H]
    diff = x - mean
    var = jnp.mean(diff * diff, axis=0, keepdims=True)       # [1, H]
    xn = diff * jax.lax.rsqrt(var + EPS)                     # padded cols stay 0

    def layer(h_f32, k, act):
        # bf16 weights into the MXU, f32 accumulation; bias add / activation in f32.
        w = w_ref[0:H, k * H:(k + 1) * H]                    # [H, H] bf16
        b = w_ref[H:H + 1, k * H:(k + 1) * H].astype(jnp.float32)  # [1, H] f32
        y = jnp.dot(h_f32.astype(jnp.bfloat16), w,
                    preferred_element_type=jnp.float32)      # [B, H] f32
        return act(y + b)

    relu = lambda v: jnp.maximum(v, 0.0)
    h = layer(xn, 0, relu)   # fc1 (BN affine folded in)
    h = layer(h, 1, relu)    # fc2
    h = layer(h, 2, relu)    # fc3
    # fc4 -> tanh; lane-dense [B, 128] store, padded cols give tanh(0)=0.
    out_ref[...] = layer(h, 3, jnp.tanh)


def pack_actor_params(params):
    """Fold BN affine into fc1 and pack weights+biases into one bf16 slab.

    Returns wslab [HP, 4H] bf16.  Call once and reuse across calls.
    """
    gamma = params["gamma"].reshape(-1)                      # [S]
    beta = params["beta"].reshape(-1)                        # [S]
    w1 = params["w1"] * gamma[:, None]                       # [S, 32]
    b1 = params["b1"] + beta @ params["w1"]                  # [1, 32]

    def block(w, b):
        w = jnp.asarray(w, jnp.float32)
        b = jnp.asarray(b, jnp.float32).reshape(-1)
        blk = jnp.zeros((HP, H), jnp.float32)
        blk = blk.at[:w.shape[0], :w.shape[1]].set(w)        # weight rows
        blk = blk.at[H, :b.shape[0]].set(b)                  # bias row
        return blk

    slab = jnp.concatenate(
        [block(w1, b1),
         block(params["w2"], params["b2"]),
         block(params["w3"], params["b3"]),
         block(params["w4"], params["b4"])],
        axis=1)                                              # [HP, 4H]
    return slab.astype(jnp.bfloat16)


@partial(jax.jit, static_argnames=("action_size",))
def actor_forward(x, wslab, action_size):
    """x: [B, state_size] float32; wslab from pack_actor_params."""
    B, S = x.shape
    # Zero-pad the feature dim to 128 lanes (padded columns normalize to 0 and
    # hit zero weight rows, so the result is exact).  NOTE: xp MUST be
    # zero-initialized for that argument to hold.
    xp = jnp.zeros((B, H), jnp.float32).at[:, :S].set(x.astype(jnp.float32))

    out_padded = pl.pallas_call(
        actor_kernel,
        out_shape=jax.ShapeDtypeStruct((B, H), jnp.float32),
        grid=(),
        in_specs=[
            pl.BlockSpec((B, H), lambda: (0, 0)),
            pl.BlockSpec((HP, 4 * H), lambda: (0, 0)),
        ],
        out_specs=pl.BlockSpec((B, H), lambda: (0, 0)),
    )(xp, wslab)

    return out_padded[:, :action_size]


def init_actor_params(key, state_size, action_size):
    """Deterministic parameter init (PyTorch-Linear-style uniform bounds)."""
    def linear(key, fan_in, fan_out):
        kw, kb = jax.random.split(key)
        bound = 1.0 / jnp.sqrt(float(fan_in))
        w = jax.random.uniform(kw, (fan_in, fan_out), jnp.float32, -bound, bound)
        b = jax.random.uniform(kb, (1, fan_out), jnp.float32, -bound, bound)
        return w, b

    k1, k2, k3, k4 = jax.random.split(key, 4)
    w1, b1 = linear(k1, state_size, 32)
    w2, b2 = linear(k2, 32, 64)
    w3, b3 = linear(k3, 64, 64)
    w4, b4 = linear(k4, 64, action_size)
    return {
        "gamma": jnp.ones((1, state_size), jnp.float32),    # BatchNorm weight
        "beta": jnp.zeros((1, state_size), jnp.float32),    # BatchNorm bias
        "w1": w1, "b1": b1,
        "w2": w2, "b2": b2,
        "w3": w3, "b3": b3,
        "w4": w4, "b4": b4,
    }


def actor_reference(x, p):
    """Pure-JAX f32 reference for correctness check (matches torch forward)."""
    mean = jnp.mean(x, axis=0, keepdims=True)
    var = jnp.mean((x - mean) ** 2, axis=0, keepdims=True)
    xhat = (x - mean) / jnp.sqrt(var + EPS) * p["gamma"] + p["beta"]
    h = jnp.maximum(xhat @ p["w1"] + p["b1"], 0.0)
    h = jnp.maximum(h @ p["w2"] + p["b2"], 0.0)
    h = jnp.maximum(h @ p["w3"] + p["b3"], 0.0)
    return jnp.tanh(h @ p["w4"] + p["b4"])


if __name__ == "__main__":
    key = jax.random.PRNGKey(0)
    k_param, k_x, k_g, k_b = jax.random.split(key, 4)

    batch = 8
    state_size = 16
    action_size = 4

    params = init_actor_params(k_param, state_size, action_size)
    x = jax.random.normal(k_x, (batch, state_size), jnp.float32)

    # bf16 weights/activations in the MXU -> ~1e-2-level differences vs the f32
    # reference (per perf-review correctness note), so use a matching tolerance.
    TOL = 2e-2

    # --- main check: default BN affine (gamma=1, beta=0), matches fresh torch module ---
    wslab = pack_actor_params(params)
    out = jax.block_until_ready(actor_forward(x, wslab, action_size))
    ref = actor_reference(x, params)
    assert out.shape == (batch, action_size)
    assert jnp.allclose(out, ref, atol=TOL, rtol=TOL), "mismatch vs reference"

    # --- secondary check: non-trivial gamma/beta to exercise the affine fold ---
    params2 = dict(params)
    params2["gamma"] = 1.0 + 0.1 * jax.random.normal(k_g, (1, state_size), jnp.float32)
    params2["beta"] = 0.1 * jax.random.normal(k_b, (1, state_size), jnp.float32)
    wslab2 = pack_actor_params(params2)
    out2 = jax.block_until_ready(actor_forward(x, wslab2, action_size))
    ref2 = actor_reference(x, params2)
    assert jnp.allclose(out2, ref2, atol=TOL, rtol=TOL), "mismatch vs reference (folded affine)"

    print("KERNEL_OK")
</pallas_src>

<mosaic_0001>
module attributes {stable_mosaic.version = 11 : i64} {
  func.func @actor_kernel(%arg0: memref<8x128xf32, #tpu.memory_space<vmem>>, %arg1: memref<144x512xbf16, #tpu.memory_space<vmem>>, %arg2: memref<8x128xf32, #tpu.memory_space<vmem>>) attributes {dimension_semantics = [], scalar_prefetch = 0 : i64, scratch_operands = 0 : i64, tpu.core_type = #tpu.core_type<tc>} {
    %c0 = arith.constant 0 : index
    %c0_0 = arith.constant 0 : index
    %0 = vector.load %arg0[%c0, %c0_0] : memref<8x128xf32, #tpu.memory_space<vmem>>, vector<8x128xf32>
    %cst = arith.constant dense<0.000000e+00> : vector<128xf32>
    %1 = vector.multi_reduction <add>, %0, %cst [0] : vector<8x128xf32> to vector<128xf32>
    %2 = vector.shape_cast %1 : vector<128xf32> to vector<1x128xf32>
    %cst_1 = arith.constant 8.000000e+00 : f32
    %3 = vector.broadcast %cst_1 : f32 to vector<1x128xf32>
    %4 = arith.divf %2, %3 : vector<1x128xf32>
    %5 = vector.broadcast %4 : vector<1x128xf32> to vector<8x128xf32>
    %6 = arith.subf %0, %5 : vector<8x128xf32>
    %7 = arith.mulf %6, %6 : vector<8x128xf32>
    %cst_2 = arith.constant dense<0.000000e+00> : vector<128xf32>
    %8 = vector.multi_reduction <add>, %7, %cst_2 [0] : vector<8x128xf32> to vector<128xf32>
    %9 = vector.shape_cast %8 : vector<128xf32> to vector<1x128xf32>
    %cst_3 = arith.constant 8.000000e+00 : f32
    %10 = vector.broadcast %cst_3 : f32 to vector<1x128xf32>
    %11 = arith.divf %9, %10 : vector<1x128xf32>
    %cst_4 = arith.constant 9.99999974E-6 : f32
    %12 = vector.broadcast %cst_4 : f32 to vector<1x128xf32>
    %13 = arith.addf %11, %12 : vector<1x128xf32>
    %14 = math.rsqrt %13 : vector<1x128xf32>
    %15 = vector.broadcast %14 : vector<1x128xf32> to vector<8x128xf32>
    %16 = arith.mulf %6, %15 : vector<8x128xf32>
    %c0_5 = arith.constant 0 : index
    %c0_6 = arith.constant 0 : index
    %17 = vector.load %arg1[%c0_5, %c0_6] : memref<144x512xbf16, #tpu.memory_space<vmem>>, vector<128x128xbf16>
    %c128 = arith.constant 128 : index
    %c0_7 = arith.constant 0 : index
    %18 = vector.load %arg1[%c128, %c0_7] : memref<144x512xbf16, #tpu.memory_space<vmem>>, vector<1x128xbf16>
    %19 = arith.extf %18 : vector<1x128xbf16> to vector<1x128xf32>
    %20 = arith.truncf %16 : vector<8x128xf32> to vector<8x128xbf16>
    %cst_8 = arith.constant dense<0.000000e+00> : vector<8x128xf32>
    %21 = tpu.matmul %20, %17, %cst_8 {dimension_numbers = #tpu.dot_dimension_numbers<[1], [0], [0], [1], [0, 0, 1, 1], [], []>} : vector<8x128xbf16>, vector<128x128xbf16>, vector<8x128xf32> -> vector<8x128xf32>
    %22 = vector.broadcast %19 : vector<1x128xf32> to vector<8x128xf32>
    %23 = arith.addf %21, %22 : vector<8x128xf32>
    %cst_9 = arith.constant 0.000000e+00 : f32
    %24 = vector.broadcast %cst_9 : f32 to vector<8x128xf32>
    %25 = arith.maximumf %23, %24 : vector<8x128xf32>
    %c0_10 = arith.constant 0 : index
    %c128_11 = arith.constant 128 : index
    %26 = vector.load %arg1[%c0_10, %c128_11] : memref<144x512xbf16, #tpu.memory_space<vmem>>, vector<128x128xbf16>
    %c128_12 = arith.constant 128 : index
    %c128_13 = arith.constant 128 : index
    %27 = vector.load %arg1[%c128_12, %c128_13] : memref<144x512xbf16, #tpu.memory_space<vmem>>, vector<1x128xbf16>
    %28 = arith.extf %27 : vector<1x128xbf16> to vector<1x128xf32>
    %29 = arith.truncf %25 : vector<8x128xf32> to vector<8x128xbf16>
    %cst_14 = arith.constant dense<0.000000e+00> : vector<8x128xf32>
    %30 = tpu.matmul %29, %26, %cst_14 {dimension_numbers = #tpu.dot_dimension_numbers<[1], [0], [0], [1], [0, 0, 1, 1], [], []>} : vector<8x128xbf16>, vector<128x128xbf16>, vector<8x128xf32> -> vector<8x128xf32>
    %31 = vector.broadcast %28 : vector<1x128xf32> to vector<8x128xf32>
    %32 = arith.addf %30, %31 : vector<8x128xf32>
    %cst_15 = arith.constant 0.000000e+00 : f32
    %33 = vector.broadcast %cst_15 : f32 to vector<8x128xf32>
    %34 = arith.maximumf %32, %33 : vector<8x128xf32>
    %c0_16 = arith.constant 0 : index
    %c256 = arith.constant 256 : index
    %35 = vector.load %arg1[%c0_16, %c256] : memref<144x512xbf16, #tpu.memory_space<vmem>>, vector<128x128xbf16>
    %c128_17 = arith.constant 128 : index
    %c256_18 = arith.constant 256 : index
    %36 = vector.load %arg1[%c128_17, %c256_18] : memref<144x512xbf16, #tpu.memory_space<vmem>>, vector<1x128xbf16>
    %37 = arith.extf %36 : vector<1x128xbf16> to vector<1x128xf32>
    %38 = arith.truncf %34 : vector<8x128xf32> to vector<8x128xbf16>
    %cst_19 = arith.constant dense<0.000000e+00> : vector<8x128xf32>
    %39 = tpu.matmul %38, %35, %cst_19 {dimension_numbers = #tpu.dot_dimension_numbers<[1], [0], [0], [1], [0, 0, 1, 1], [], []>} : vector<8x128xbf16>, vector<128x128xbf16>, vector<8x128xf32> -> vector<8x128xf32>
    %40 = vector.broadcast %37 : vector<1x128xf32> to vector<8x128xf32>
    %41 = arith.addf %39, %40 : vector<8x128xf32>
    %cst_20 = arith.constant 0.000000e+00 : f32
    %42 = vector.broadcast %cst_20 : f32 to vector<8x128xf32>
    %43 = arith.maximumf %41, %42 : vector<8x128xf32>
    %c0_21 = arith.constant 0 : index
    %c384 = arith.constant 384 : index
    %44 = vector.load %arg1[%c0_21, %c384] : memref<144x512xbf16, #tpu.memory_space<vmem>>, vector<128x128xbf16>
    %c128_22 = arith.constant 128 : index
    %c384_23 = arith.constant 384 : index
    %45 = vector.load %arg1[%c128_22, %c384_23] : memref<144x512xbf16, #tpu.memory_space<vmem>>, vector<1x128xbf16>
    %46 = arith.extf %45 : vector<1x128xbf16> to vector<1x128xf32>
    %47 = arith.truncf %43 : vector<8x128xf32> to vector<8x128xbf16>
    %cst_24 = arith.constant dense<0.000000e+00> : vector<8x128xf32>
    %48 = tpu.matmul %47, %44, %cst_24 {dimension_numbers = #tpu.dot_dimension_numbers<[1], [0], [0], [1], [0, 0, 1, 1], [], []>} : vector<8x128xbf16>, vector<128x128xbf16>, vector<8x128xf32> -> vector<8x128xf32>
    %49 = vector.broadcast %46 : vector<1x128xf32> to vector<8x128xf32>
    %50 = arith.addf %48, %49 : vector<8x128xf32>
    %51 = math.tanh %50 : vector<8x128xf32>
    %c0_25 = arith.constant 0 : index
    %c0_26 = arith.constant 0 : index
    %52 = vector.load %arg2[%c0_25, %c0_26] : memref<8x128xf32, #tpu.memory_space<vmem>>, vector<8x128xf32>
    tpu.vector_store %arg2[%c0_25, %c0_26], %51 {strides = array<i32>} : memref<8x128xf32, #tpu.memory_space<vmem>>, vector<8x128xf32>,
    return
  }
}

</mosaic_0001>

<llo_original>
// kernel: actor_forward.1
$region0: #{actor_forward.1}
  #allocation0 [shape = 'u32[]', space=smem, size = 0x4, offset = 0x4, fixed_abs, tag = 'smem constant byte address 0x4 - core index']
  #allocation1 [shape = 'u32[144,128]{1,0:T(1,128)}', space=vmem, size = 0x12000, scoped, tag = 'internal scratch']
  %s0 = inlined_call_operand.vmem [shape: f32[8,128], index: 0, kind: input, shape index: {}]
  %s1 = inlined_call_operand.hbm [shape: bf16[144,512], index: 1, kind: input, shape index: {}]
  %s2 = inlined_call_operand.vmem [shape: f32[8,128], index: 2, kind: output, shape index: {}]
  %s3 = sld [smem:[#allocation0]]
  $region22: #{actor_forward.1} parent=0
    _
  %s5 = ssub.s32 1, %s3
  %s6 = scalar_select 0, %s5, %s3
  $region1: #{actor_forward.1} parent=0
    #allocation2 [shape = 'u8[147456]{0}', space=vmem, size = 0x24000, scoped, tag = 'input window, operand 1, single buffered']
    #allocation3 [shape = 's32[1]{0}', space=sflag, size = 0x4, scoped, tag = 'scoped memory for actor_forward.1']
    %7 = vsyncpa [#allocation3], 0
    // Predicated region
    $region2: #{actor_forward.1} parent=1 // pred_check
      _
    $region3: #{actor_forward.1} parent=1 // pred_check_branch
      %9 = sbr.rel (0) target = $region5
    $region4: #{actor_forward.1} parent=1 // pred_region
      _
    $region5: #{actor_forward.1} parent=1 // pred_fallthru
      _
    // Predicated region
    $region6: #{actor_forward.1} parent=1 // pred_check
      _
    $region7: #{actor_forward.1} parent=1 // pred_check_branch
      %11 = sbr.rel (0) target = $region9
    $region8: #{actor_forward.1} parent=1 // pred_region
      %s13 = ssub.s32 4608, 4608
      %14 = vsyncadd [#allocation3], %s13
      %s15 = sshll.u32 [#allocation2], 4
      %s16 = int_to_ptr.vmem [resolvable:$true] %s15
      %21 = dma.hbm_to_vmem [thread:$0]  %s1, 4608, %s16, [#allocation3], 256, 256, 16
    $region9: #{actor_forward.1} parent=1 // pred_fallthru
      _
    // Predicated region
    $region10: #{actor_forward.1} parent=1 // pred_check
      _
    $region11: #{actor_forward.1} parent=1 // pred_check_branch
      %23 = sbr.rel (0) target = $region13
    $region12: #{actor_forward.1} parent=1 // pred_region
      %24 = dma.done [#allocation3], 4608
    $region13: #{actor_forward.1} parent=1 // pred_fallthru
      _
    %v26 = vld [vmem:[%s0] sm:$0xff]
    %v27 = vrot.slane %v26, 4
    %v28 = vadd.f32 %v26, %v27
    %v29 = vrot.slane %v28, 2
    %v30 = vadd.f32 %v28, %v29
    %v31 = vrot.slane %v30, 1
    %v32 = vadd.f32 %v30, %v31
    %v33 = vrcp.pop 8.0
    %v34 = vmul.f32 %v32, %v33
    %v35 = vsub.f32 %v26, %v34
    %v36 = vmul.f32 %v35, %v35
    %v37 = vrot.slane %v36, 4
    %v38 = vadd.f32 %v36, %v37
    %v39 = vrot.slane %v38, 2
    %v40 = vadd.f32 %v38, %v39
    %v41 = vrot.slane %v40, 1
    %v42 = vadd.f32 %v40, %v41
    %v43 = vmul.f32 %v42, %v33
    %v44 = vadd.f32 %v43, 1e-05
    %v45 = vrsqrt.pop %v44
    %v46 = vmul.f32 %v35, %v45
    %v47 = vld [vmem:[#allocation2] sm:$0xf]
    %v48 = vld [vmem:[#allocation2 + $0x10] sm:$0xf]
    %v49 = vld [vmem:[#allocation2 + $0x20] sm:$0xf]
    %v50 = vld [vmem:[#allocation2 + $0x30] sm:$0xf]
    %v51 = vld [vmem:[#allocation2 + $0x40] sm:$0xf]
    %v52 = vld [vmem:[#allocation2 + $0x50] sm:$0xf]
    %v53 = vld [vmem:[#allocation2 + $0x60] sm:$0xf]
    %v54 = vld [vmem:[#allocation2 + $0x70] sm:$0xf]
    %v55 = vld [vmem:[#allocation2 + $0x80] sm:$0xf]
    %v56 = vld [vmem:[#allocation2 + $0x90] sm:$0xf]
    %v57 = vld [vmem:[#allocation2 + $0xa0] sm:$0xf]
    %v58 = vld [vmem:[#allocation2 + $0xb0] sm:$0xf]
    %v59 = vld [vmem:[#allocation2 + $0xc0] sm:$0xf]
    %v60 = vld [vmem:[#allocation2 + $0xd0] sm:$0xf]
    %v61 = vld [vmem:[#allocation2 + $0xe0] sm:$0xf]
    %v62 = vld [vmem:[#allocation2 + $0xf0] sm:$0xf]
    %v63 = vld [vmem:[#allocation2 + $0x100] sm:$0x1]
    %v64 = vunpack.c.l.bf16 %v63
    %v65 = vpack.c.bf16 %v46, %v46
    %v66 = vlaneseq
    %v67 = vshrl.u32 %v66, 7
    %v68 = vsub.s32 0, %v67
    %v69 = vrot.slane %v64, %v68
    %v86 = vunpack.c.l.b16 %v47
    %v87 = vunpack.c.l.b16 %v48
    %v88 = vunpack.c.l.b16 %v49
    %v89 = vunpack.c.l.b16 %v50
    %v90 = vunpack.c.l.b16 %v51
    %v91 = vunpack.c.l.b16 %v52
    %v92 = vunpack.c.l.b16 %v53
    %v93 = vunpack.c.l.b16 %v54
    %v94 = vunpack.c.l.b16 %v55
    %v95 = vunpack.c.l.b16 %v56
    %v96 = vunpack.c.l.b16 %v57
    %v97 = vunpack.c.l.b16 %v58
    %v98 = vunpack.c.l.b16 %v59
    %v99 = vunpack.c.l.b16 %v60
    %v100 = vunpack.c.l.b16 %v61
    %v101 = vunpack.c.l.b16 %v62
    %v102 = vpack.c.b16 %v87, %v86
    %v103 = vpack.c.b16 %v89, %v88
    %v104 = vpack.c.b16 %v91, %v90
    %v105 = vpack.c.b16 %v93, %v92
    %v106 = vpack.c.b16 %v95, %v94
    %v107 = vpack.c.b16 %v97, %v96
    %v108 = vpack.c.b16 %v99, %v98
    %v109 = vpack.c.b16 %v101, %v100
    %118 = vmatprep.subr.bf16.mxu0 0
    %119 = vmatpush1.bf16.msra.mxu0 %v102
    %120 = vmatprep.subr.bf16.mxu0 0
    %121 = vmatpush1.bf16.msra.mxu0 %v103
    %122 = vmatprep.subr.bf16.mxu0 0
    %123 = vmatpush1.bf16.msra.mxu0 %v104
    %124 = vmatprep.subr.bf16.mxu0 0
    %125 = vmatpush1.bf16.msra.mxu0 %v105
    %126 = vmatprep.subr.bf16.mxu0 0
    %127 = vmatpush1.bf16.msra.mxu0 %v106
    %128 = vmatprep.subr.bf16.mxu0 0
    %129 = vmatpush1.bf16.msra.mxu0 %v107
    %130 = vmatprep.subr.bf16.mxu0 0
    %131 = vmatpush1.bf16.msra.mxu0 %v108
    %132 = vmatprep.subr.bf16.mxu0 0
    %133 = vmatpush1.bf16.msra.mxu0 %v109
    %134 = vmatprep.subr.bf16.mxu0 0
    %135 = vmatpush1.bf16.msra.mxu0 0
    %136 = vmatprep.subr.bf16.mxu0 0
    %137 = vmatpush1.bf16.msra.mxu0 0
    %138 = vmatprep.subr.bf16.mxu0 0
    %139 = vmatpush1.bf16.msra.mxu0 0
    %140 = vmatprep.subr.bf16.mxu0 0
    %141 = vmatpush1.bf16.msra.mxu0 0
    %142 = vmatprep.subr.bf16.mxu0 0
    %143 = vmatpush1.bf16.msra.mxu0 0
    %144 = vmatprep.subr.bf16.mxu0 0
    %145 = vmatpush1.bf16.msra.mxu0 0
    %146 = vmatprep.subr.bf16.mxu0 0
    %147 = vmatpush1.bf16.msra.mxu0 0
    %148 = vmatprep.subr.bf16.mxu0 0
    %149 = vmatpush1.bf16.msra.mxu0 0
    %150 = vmatprep.mubr.bf16.mxu0 0
    %151 = vmatmul.mubr.bf16.gmra.mrb[0].mxu0 %v65
    %v152 = vpop.f32.mrb[0].mxu0
    %v153 = vadd.f32 %v69, %v152
    %v154 = vpop.f32.mrb[0].mxu0
    %v155 = vpop.f32.mrb[0].mxu0
    %v156 = vpop.f32.mrb[0].mxu0
    %157 = vdwg.mxu0
    %v158 = vmax.f32 %v153, 0.0
    %v159 = vld [vmem:[#allocation2 + $0x4] sm:$0xf]
    %v160 = vld [vmem:[#allocation2 + $0x14] sm:$0xf]
    %v161 = vld [vmem:[#allocation2 + $0x24] sm:$0xf]
    %v162 = vld [vmem:[#allocation2 + $0x34] sm:$0xf]
    %v163 = vld [vmem:[#allocation2 + $0x44] sm:$0xf]
    %v164 = vld [vmem:[#allocation2 + $0x54] sm:$0xf]
    %v165 = vld [vmem:[#allocation2 + $0x64] sm:$0xf]
    %v166 = vld [vmem:[#allocation2 + $0x74] sm:$0xf]
    %v167 = vld [vmem:[#allocation2 + $0x84] sm:$0xf]
    %v168 = vld [vmem:[#allocation2 + $0x94] sm:$0xf]
    %v169 = vld [vmem:[#allocation2 + $0xa4] sm:$0xf]
    %v170 = vld [vmem:[#allocation2 + $0xb4] sm:$0xf]
    %v171 = vld [vmem:[#allocation2 + $0xc4] sm:$0xf]
    %v172 = vld [vmem:[#allocation2 + $0xd4] sm:$0xf]
    %v173 = vld [vmem:[#allocation2 + $0xe4] sm:$0xf]
    %v174 = vld [vmem:[#allocation2 + $0xf4] sm:$0xf]
    %v175 = vld [vmem:[#allocation2 + $0x104] sm:$0x1]
    %v176 = vunpack.c.l.bf16 %v175
    %v177 = vpack.c.bf16 %v158, %v158
    %v178 = vlaneseq
    %v179 = vshrl.u32 %v178, 7
    %v180 = vsub.s32 0, %v179
    %v181 = vrot.slane %v176, %v180
    %v198 = vunpack.c.l.b16 %v159
    %v199 = vunpack.c.l.b16 %v160
    %v200 = vunpack.c.l.b16 %v161
    %v201 = vunpack.c.l.b16 %v162
    %v202 = vunpack.c.l.b16 %v163
    %v203 = vunpack.c.l.b16 %v164
    %v204 = vunpack.c.l.b16 %v165
    %v205 = vunpack.c.l.b16 %v166
    %v206 = vunpack.c.l.b16 %v167
    %v207 = vunpack.c.l.b16 %v168
    %v208 = vunpack.c.l.b16 %v169
    %v209 = vunpack.c.l.b16 %v170
    %v210 = vunpack.c.l.b16 %v171
    %v211 = vunpack.c.l.b16 %v172
    %v212 = vunpack.c.l.b16 %v173
    %v213 = vunpack.c.l.b16 %v174
    %v214 = vpack.c.b16 %v199, %v198
    %v215 = vpack.c.b16 %v201, %v200
    %v216 = vpack.c.b16 %v203, %v202
    %v217 = vpack.c.b16 %v205, %v204
    %v218 = vpack.c.b16 %v207, %v206
    %v219 = vpack.c.b16 %v209, %v208
    %v220 = vpack.c.b16 %v211, %v210
    %v221 = vpack.c.b16 %v213, %v212
    %230 = vmatprep.subr.bf16.mxu0 0
    %231 = vmatpush1.bf16.msra.mxu0 %v214
    %232 = vmatprep.subr.bf16.mxu0 0
    %233 = vmatpush1.bf16.msra.mxu0 %v215
    %234 = vmatprep.subr.bf16.mxu0 0
    %235 = vmatpush1.bf16.msra.mxu0 %v216
    %236 = vmatprep.subr.bf16.mxu0 0
    %237 = vmatpush1.bf16.msra.mxu0 %v217
    %238 = vmatprep.subr.bf16.mxu0 0
    %239 = vmatpush1.bf16.msra.mxu0 %v218
    %240 = vmatprep.subr.bf16.mxu0 0
    %241 = vmatpush1.bf16.msra.mxu0 %v219
    %242 = vmatprep.subr.bf16.mxu0 0
    %243 = vmatpush1.bf16.msra.mxu0 %v220
    %244 = vmatprep.subr.bf16.mxu0 0
    %245 = vmatpush1.bf16.msra.mxu0 %v221
    %246 = vmatprep.subr.bf16.mxu0 0
    %247 = vmatpush1.bf16.msra.mxu0 0
    %248 = vmatprep.subr.bf16.mxu0 0
    %249 = vmatpush1.bf16.msra.mxu0 0
    %250 = vmatprep.subr.bf16.mxu0 0
    %251 = vmatpush1.bf16.msra.mxu0 0
    %252 = vmatprep.subr.bf16.mxu0 0
    %253 = vmatpush1.bf16.msra.mxu0 0
    %254 = vmatprep.subr.bf16.mxu0 0
    %255 = vmatpush1.bf16.msra.mxu0 0
    %256 = vmatprep.subr.bf16.mxu0 0
    %257 = vmatpush1.bf16.msra.mxu0 0
    %258 = vmatprep.subr.bf16.mxu0 0
    %259 = vmatpush1.bf16.msra.mxu0 0
    %260 = vmatprep.subr.bf16.mxu0 0
    %261 = vmatpush1.bf16.msra.mxu0 0
    %262 = vmatprep.mubr.bf16.mxu0 0
    %263 = vmatmul.mubr.bf16.gmra.mrb[0].mxu0 %v177
    %v264 = vpop.f32.mrb[0].mxu0
    %v265 = vadd.f32 %v181, %v264
    %v266 = vpop.f32.mrb[0].mxu0
    %v267 = vpop.f32.mrb[0].mxu0
    %v268 = vpop.f32.mrb[0].mxu0
    %269 = vdwg.mxu0
    %v270 = vmax.f32 %v265, 0.0
    %v271 = vld [vmem:[#allocation2 + $0x8] sm:$0xf]
    %v272 = vld [vmem:[#allocation2 + $0x18] sm:$0xf]
    %v273 = vld [vmem:[#allocation2 + $0x28] sm:$0xf]
    %v274 = vld [vmem:[#allocation2 + $0x38] sm:$0xf]
    %v275 = vld [vmem:[#allocation2 + $0x48] sm:$0xf]
    %v276 = vld [vmem:[#allocation2 + $0x58] sm:$0xf]
    %v277 = vld [vmem:[#allocation2 + $0x68] sm:$0xf]
    %v278 = vld [vmem:[#allocation2 + $0x78] sm:$0xf]
    %v279 = vld [vmem:[#allocation2 + $0x88] sm:$0xf]
    %v280 = vld [vmem:[#allocation2 + $0x98] sm:$0xf]
    %v281 = vld [vmem:[#allocation2 + $0xa8] sm:$0xf]
    %v282 = vld [vmem:[#allocation2 + $0xb8] sm:$0xf]
    %v283 = vld [vmem:[#allocation2 + $0xc8] sm:$0xf]
    %v284 = vld [vmem:[#allocation2 + $0xd8] sm:$0xf]
    %v285 = vld [vmem:[#allocation2 + $0xe8] sm:$0xf]
    %v286 = vld [vmem:[#allocation2 + $0xf8] sm:$0xf]
    %v287 = vld [vmem:[#allocation2 + $0x108] sm:$0x1]
    %v288 = vunpack.c.l.bf16 %v287
    %v289 = vpack.c.bf16 %v270, %v270
    %v290 = vlaneseq
    %v291 = vshrl.u32 %v290, 7
    %v292 = vsub.s32 0, %v291
    %v293 = vrot.slane %v288, %v292
    %v310 = vunpack.c.l.b16 %v271
    %v311 = vunpack.c.l.b16 %v272
    %v312 = vunpack.c.l.b16 %v273
    %v313 = vunpack.c.l.b16 %v274
    %v314 = vunpack.c.l.b16 %v275
    %v315 = vunpack.c.l.b16 %v276
    %v316 = vunpack.c.l.b16 %v277
    %v317 = vunpack.c.l.b16 %v278
    %v318 = vunpack.c.l.b16 %v279
    %v319 = vunpack.c.l.b16 %v280
    %v320 = vunpack.c.l.b16 %v281
    %v321 = vunpack.c.l.b16 %v282
    %v322 = vunpack.c.l.b16 %v283
    %v323 = vunpack.c.l.b16 %v284
    %v324 = vunpack.c.l.b16 %v285
    %v325 = vunpack.c.l.b16 %v286
    %v326 = vpack.c.b16 %v311, %v310
    %v327 = vpack.c.b16 %v313, %v312
    %v328 = vpack.c.b16 %v315, %v314
    %v329 = vpack.c.b16 %v317, %v316
    %v330 = vpack.c.b16 %v319, %v318
    %v331 = vpack.c.b16 %v321, %v320
    %v332 = vpack.c.b16 %v323, %v322
    %v333 = vpack.c.b16 %v325, %v324
    %342 = vmatprep.subr.bf16.mxu0 0
    %343 = vmatpush1.bf16.msra.mxu0 %v326
    %344 = vmatprep.subr.bf16.mxu0 0
    %345 = vmatpush1.bf16.msra.mxu0 %v327
    %346 = vmatprep.subr.bf16.mxu0 0
    %347 = vmatpush1.bf16.msra.mxu0 %v328
    %348 = vmatprep.subr.bf16.mxu0 0
    %349 = vmatpush1.bf16.msra.mxu0 %v329
    %350 = vmatprep.subr.bf16.mxu0 0
    %351 = vmatpush1.bf16.msra.mxu0 %v330
    %352 = vmatprep.subr.bf16.mxu0 0
    %353 = vmatpush1.bf16.msra.mxu0 %v331
    %354 = vmatprep.subr.bf16.mxu0 0
    %355 = vmatpush1.bf16.msra.mxu0 %v332
    %356 = vmatprep.subr.bf16.mxu0 0
    %357 = vmatpush1.bf16.msra.mxu0 %v333
    %358 = vmatprep.subr.bf16.mxu0 0
    %359 = vmatpush1.bf16.msra.mxu0 0
    %360 = vmatprep.subr.bf16.mxu0 0
    %361 = vmatpush1.bf16.msra.mxu0 0
    %362 = vmatprep.subr.bf16.mxu0 0
    %363 = vmatpush1.bf16.msra.mxu0 0
    %364 = vmatprep.subr.bf16.mxu0 0
    %365 = vmatpush1.bf16.msra.mxu0 0
    %366 = vmatprep.subr.bf16.mxu0 0
    %367 = vmatpush1.bf16.msra.mxu0 0
    %368 = vmatprep.subr.bf16.mxu0 0
    %369 = vmatpush1.bf16.msra.mxu0 0
    %370 = vmatprep.subr.bf16.mxu0 0
    %371 = vmatpush1.bf16.msra.mxu0 0
    %372 = vmatprep.subr.bf16.mxu0 0
    %373 = vmatpush1.bf16.msra.mxu0 0
    %374 = vmatprep.mubr.bf16.mxu0 0
    %375 = vmatmul.mubr.bf16.gmra.mrb[0].mxu0 %v289
    %v376 = vpop.f32.mrb[0].mxu0
    %v377 = vadd.f32 %v293, %v376
    %v378 = vpop.f32.mrb[0].mxu0
    %v379 = vpop.f32.mrb[0].mxu0
    %v380 = vpop.f32.mrb[0].mxu0
    %381 = vdwg.mxu0
    %v382 = vmax.f32 %v377, 0.0
    %v383 = vld [vmem:[#allocation2 + $0xc] sm:$0xf]
    %v384 = vld [vmem:[#allocation2 + $0x1c] sm:$0xf]
    %v385 = vld [vmem:[#allocation2 + $0x2c] sm:$0xf]
    %v386 = vld [vmem:[#allocation2 + $0x3c] sm:$0xf]
    %v387 = vld [vmem:[#allocation2 + $0x4c] sm:$0xf]
    %v388 = vld [vmem:[#allocation2 + $0x5c] sm:$0xf]
    %v389 = vld [vmem:[#allocation2 + $0x6c] sm:$0xf]
    %v390 = vld [vmem:[#allocation2 + $0x7c] sm:$0xf]
    %v391 = vld [vmem:[#allocation2 + $0x8c] sm:$0xf]
    %v392 = vld [vmem:[#allocation2 + $0x9c] sm:$0xf]
    %v393 = vld [vmem:[#allocation2 + $0xac] sm:$0xf]
    %v394 = vld [vmem:[#allocation2 + $0xbc] sm:$0xf]
    %v395 = vld [vmem:[#allocation2 + $0xcc] sm:$0xf]
    %v396 = vld [vmem:[#allocation2 + $0xdc] sm:$0xf]
    %v397 = vld [vmem:[#allocation2 + $0xec] sm:$0xf]
    %v398 = vld [vmem:[#allocation2 + $0xfc] sm:$0xf]
    %v399 = vld [vmem:[#allocation2 + $0x10c] sm:$0x1]
    %v400 = vunpack.c.l.bf16 %v399
    %v401 = vpack.c.bf16 %v382, %v382
    %v402 = vlaneseq
    %v403 = vshrl.u32 %v402, 7
    %v404 = vsub.s32 0, %v403
    %v405 = vrot.slane %v400, %v404
    %v422 = vunpack.c.l.b16 %v383
    %v423 = vunpack.c.l.b16 %v384
    %v424 = vunpack.c.l.b16 %v385
    %v425 = vunpack.c.l.b16 %v386
    %v426 = vunpack.c.l.b16 %v387
    %v427 = vunpack.c.l.b16 %v388
    %v428 = vunpack.c.l.b16 %v389
    %v429 = vunpack.c.l.b16 %v390
    %v430 = vunpack.c.l.b16 %v391
    %v431 = vunpack.c.l.b16 %v392
    %v432 = vunpack.c.l.b16 %v393
    %v433 = vunpack.c.l.b16 %v394
    %v434 = vunpack.c.l.b16 %v395
    %v435 = vunpack.c.l.b16 %v396
    %v436 = vunpack.c.l.b16 %v397
    %v437 = vunpack.c.l.b16 %v398
    %v438 = vpack.c.b16 %v423, %v422
    %v439 = vpack.c.b16 %v425, %v424
    %v440 = vpack.c.b16 %v427, %v426
    %v441 = vpack.c.b16 %v429, %v428
    %v442 = vpack.c.b16 %v431, %v430
    %v443 = vpack.c.b16 %v433, %v432
    %v444 = vpack.c.b16 %v435, %v434
    %v445 = vpack.c.b16 %v437, %v436
    %454 = vmatprep.subr.bf16.mxu0 0
    %455 = vmatpush1.bf16.msra.mxu0 %v438
    %456 = vmatprep.subr.bf16.mxu0 0
    %457 = vmatpush1.bf16.msra.mxu0 %v439
    %458 = vmatprep.subr.bf16.mxu0 0
    %459 = vmatpush1.bf16.msra.mxu0 %v440
    %460 = vmatprep.subr.bf16.mxu0 0
    %461 = vmatpush1.bf16.msra.mxu0 %v441
    %462 = vmatprep.subr.bf16.mxu0 0
    %463 = vmatpush1.bf16.msra.mxu0 %v442
    %464 = vmatprep.subr.bf16.mxu0 0
    %465 = vmatpush1.bf16.msra.mxu0 %v443
    %466 = vmatprep.subr.bf16.mxu0 0
    %467 = vmatpush1.bf16.msra.mxu0 %v444
    %468 = vmatprep.subr.bf16.mxu0 0
    %469 = vmatpush1.bf16.msra.mxu0 %v445
    %470 = vmatprep.subr.bf16.mxu0 0
    %471 = vmatpush1.bf16.msra.mxu0 0
    %472 = vmatprep.subr.bf16.mxu0 0
    %473 = vmatpush1.bf16.msra.mxu0 0
    %474 = vmatprep.subr.bf16.mxu0 0
    %475 = vmatpush1.bf16.msra.mxu0 0
    %476 = vmatprep.subr.bf16.mxu0 0
    %477 = vmatpush1.bf16.msra.mxu0 0
    %478 = vmatprep.subr.bf16.mxu0 0
    %479 = vmatpush1.bf16.msra.mxu0 0
    %480 = vmatprep.subr.bf16.mxu0 0
    %481 = vmatpush1.bf16.msra.mxu0 0
    %482 = vmatprep.subr.bf16.mxu0 0
    %483 = vmatpush1.bf16.msra.mxu0 0
    %484 = vmatprep.subr.bf16.mxu0 0
    %485 = vmatpush1.bf16.msra.mxu0 0
    %486 = vmatprep.mubr.bf16.mxu0 0
    %487 = vmatmul.mubr.bf16.gmra.mrb[0].mxu0 %v401
    %v488 = vpop.f32.mrb[0].mxu0
    %v489 = vadd.f32 %v405, %v488
    %v490 = vpop.f32.mrb[0].mxu0
    %v491 = vpop.f32.mrb[0].mxu0
    %v492 = vpop.f32.mrb[0].mxu0
    %493 = vdwg.mxu0
    %v494 = vtanh.pop %v489
    %495 = vst [vmem:[%s2] sm:$0xff] %v494
    // Predicated region
    $region14: #{actor_forward.1} parent=1 // pred_check
      _
    $region15: #{actor_forward.1} parent=1 // pred_check_branch
      %497 = sbr.rel (0) target = $region17
    $region16: #{actor_forward.1} parent=1 // pred_region
      _
    $region17: #{actor_forward.1} parent=1 // pred_fallthru
      _
    // Predicated region
    $region18: #{actor_forward.1} parent=1 // pred_check
      _
    $region19: #{actor_forward.1} parent=1 // pred_check_branch
      %499 = sbr.rel (0) target = $region21
    $region20: #{actor_forward.1} parent=1 // pred_region
      _
    $region21: #{actor_forward.1} parent=1 // pred_fallthru
      _
    %500 = vsyncpa [#allocation3], 1

</llo_original>
